<compile_context>
chip_gen: v5e
topology: v5e:2x2
jax: 0.10.0
libtpu: 0.0.40
codegen_flags: <defaults>
</compile_context>

<pallas_src>
import functools

import numpy as np
import jax
import jax.numpy as jnp
from jax.experimental import pallas as pl
from jax.experimental.pallas import tpu as pltpu

LANE = 128


def _round_up(x, m):
    return ((x + m - 1) // m) * m


# ------------------------------ Pallas kernel --------------------------------

def _make_fused_gcn_kernel(nr_layers, num_classes):
    """Builds the per-graph fused forward kernel.

    Kernel args (after the scalar-prefetch counts ref):
      a_ref   : (1, n_pad, n_pad) bf16   normalized adjacency of this graph
      x_ref   : (1, n_pad, f_pad) bf16   node features of this graph
      w_l,b_l : conv weights / biases (constant index_map -> resident across the grid)
      lw, lb  : readout weight / bias
      o_ref   : (1, 1, c_pad) f32        softmax probabilities for this graph
    """

    def kernel(counts_ref, a_ref, x_ref, *refs):
        o_ref = refs[-1]
        lw_ref = refs[2 * nr_layers]
        lb_ref = refs[2 * nr_layers + 1]

        g = pl.program_id(0)
        a = a_ref[0]                                   # (n_pad, n_pad) bf16
        h = x_ref[0]                                   # (n_pad, f_pad) bf16

        # GCNConv stack, reassociated as A @ (H @ W): the heavy n_pad^2 matmul touches the
        # per-graph A exactly once per layer; all operands stay resident in VMEM.
        for l in range(nr_layers):
            w = refs[2 * l][...]                       # (in_pad, h_pad) bf16
            b = refs[2 * l + 1][...]                   # (1, h_pad)      f32
            hw = jnp.dot(h, w, preferred_element_type=jnp.float32)
            ah = jnp.dot(a, hw.astype(jnp.bfloat16), preferred_element_type=jnp.float32)
            h = jnp.maximum(ah + b, 0.0).astype(jnp.bfloat16)
            # dropout == identity (eval semantics)

        # global_mean_pool over the real (unpadded) nodes of this graph. Padded rows can hold
        # relu(bias) junk (their A rows are all zero), so mask them before the reduction.
        n_pad = h.shape[0]
        cnt = jnp.maximum(counts_ref[g], 1)
        row_ids = jax.lax.broadcasted_iota(jnp.int32, (n_pad, 1), 0)
        row_mask = (row_ids < cnt).astype(jnp.float32)
        pooled = jnp.sum(h.astype(jnp.float32) * row_mask, axis=0, keepdims=True)
        pooled = pooled / cnt.astype(jnp.float32)      # (1, h_pad)

        # Linear readout + softmax (tiny, f32). Padded class lanes are masked to -inf-ish so
        # the lane-dense c_pad-wide output still holds an exact softmax over real classes.
        logits = jnp.dot(pooled.astype(jnp.bfloat16), lw_ref[...],
                         preferred_element_type=jnp.float32) + lb_ref[...]
        c_pad = logits.shape[1]
        cls_ids = jax.lax.broadcasted_iota(jnp.int32, (1, c_pad), 1)
        logits = jnp.where(cls_ids < num_classes, logits, -1e30)
        m = jnp.max(logits, axis=1, keepdims=True)
        e = jnp.exp(logits - m)
        o_ref[0] = (e / jnp.sum(e, axis=1, keepdims=True)).astype(o_ref.dtype)

    return kernel


# ------------------------------ pallas_call wrapper --------------------------

@functools.partial(jax.jit, static_argnames=("num_classes",))
def gcn_forward(counts, a_blk, x_blk, conv_ws, conv_bs, lin_w, lin_b, *, num_classes):
    g, n_pad, _ = a_blk.shape
    f_pad = x_blk.shape[2]
    h_pad = conv_ws[0].shape[1]
    c_pad = lin_w.shape[1]
    nr_layers = len(conv_ws)

    in_specs = [
        pl.BlockSpec((1, n_pad, n_pad), lambda i, cnt: (i, 0, 0)),   # A_g  (per-graph block)
        pl.BlockSpec((1, n_pad, f_pad), lambda i, cnt: (i, 0, 0)),   # X_g
    ]
    operands = [a_blk, x_blk]
    for w, b in zip(conv_ws, conv_bs):
        in_specs.append(pl.BlockSpec(w.shape, lambda i, cnt: (0, 0)))  # resident weight
        in_specs.append(pl.BlockSpec(b.shape, lambda i, cnt: (0, 0)))  # resident bias
        operands += [w, b]
    in_specs.append(pl.BlockSpec(lin_w.shape, lambda i, cnt: (0, 0)))
    in_specs.append(pl.BlockSpec(lin_b.shape, lambda i, cnt: (0, 0)))
    operands += [lin_w, lin_b]

    # VMEM budget derived from the real per-graph working set; cap at 64 MiB (safe on v7x).
    a_bytes = n_pad * n_pad * 2
    x_bytes = n_pad * f_pad * 2
    w_bytes = sum(int(np.prod(w.shape)) * 2 for w in conv_ws) + lin_w.shape[0] * c_pad * 2
    tmp_bytes = 4 * n_pad * max(f_pad, h_pad) * 4
    vmem_limit = int(min(64 * 2**20,
                         max(16 * 2**20,
                             2 * (a_bytes + x_bytes) + w_bytes + tmp_bytes + (4 << 20))))

    out = pl.pallas_call(
        _make_fused_gcn_kernel(nr_layers, num_classes),
        out_shape=jax.ShapeDtypeStruct((g, 1, c_pad), jnp.float32),
        grid_spec=pltpu.PrefetchScalarGridSpec(
            num_scalar_prefetch=1,          # per-graph node counts, read in SMEM
            grid=(g,),
            in_specs=in_specs,
            out_specs=pl.BlockSpec((1, 1, c_pad), lambda i, cnt: (i, 0, 0)),
        ),
        compiler_params=pltpu.CompilerParams(
            dimension_semantics=("parallel",),   # graphs are independent -> v7x 2-TC sharding
            vmem_limit_bytes=vmem_limit),
    )(counts, *operands)
    return out[:, 0, :num_classes]


# -------------------------------- JAX glue -----------------------------------

def build_norm_adj(edge_index, num_nodes):
    """Dense GCN-normalized adjacency with self-loops: D^-1/2 (A + I) D^-1/2.
    Duplicate edges accumulate (.add), matching PyG gcn_norm's degree counting."""
    src, dst = edge_index[0], edge_index[1]
    a = jnp.zeros((num_nodes, num_nodes), jnp.float32)
    a = a.at[dst, src].add(1.0)
    a = a + jnp.eye(num_nodes, dtype=jnp.float32)
    deg = jnp.sum(a, axis=1)
    dinv = jax.lax.rsqrt(jnp.maximum(deg, 1e-12))
    return a * dinv[:, None] * dinv[None, :]


def pack_graphs(xs, edge_indices, n_pad, f_pad):
    """Pack per-graph features and normalized adjacencies into padded stacks.

    Zero padding is exact: padded A rows/cols and padded feature lanes are zero, and the
    kernel masks padded node rows out of the mean pool.
    """
    g = len(xs)
    a_blk = np.zeros((g, n_pad, n_pad), np.float32)
    x_blk = np.zeros((g, n_pad, f_pad), np.float32)
    counts = np.zeros((g,), np.int32)
    for i, (x, ei) in enumerate(zip(xs, edge_indices)):
        n = int(x.shape[0])
        counts[i] = n
        a_blk[i, :n, :n] = np.asarray(build_norm_adj(ei, n))
        x_blk[i, :n, : x.shape[1]] = np.asarray(x)
    return (jnp.asarray(a_blk, dtype=jnp.bfloat16),
            jnp.asarray(x_blk, dtype=jnp.bfloat16),
            jnp.asarray(counts))


def init_params(key, num_features, num_classes, hidden_dim=64, nr_layers=2):
    params = {"conv_w": [], "conv_b": []}
    dims = [num_features] + [hidden_dim] * nr_layers
    for i in range(nr_layers):
        key, k1, k2 = jax.random.split(key, 3)
        fan_in, fan_out = dims[i], dims[i + 1]
        scale = jnp.sqrt(6.0 / (fan_in + fan_out))          # glorot-uniform-ish, deterministic
        params["conv_w"].append(jax.random.uniform(k1, (fan_in, fan_out),
                                                   jnp.float32, -scale, scale))
        params["conv_b"].append(jax.random.uniform(k2, (fan_out,), jnp.float32, -0.1, 0.1))
    key, k1, k2 = jax.random.split(key, 3)
    scale = jnp.sqrt(1.0 / hidden_dim)                      # module hardcodes Linear(64, C)
    params["lin_w"] = jax.random.uniform(k1, (hidden_dim, num_classes),
                                         jnp.float32, -scale, scale)
    params["lin_b"] = jax.random.uniform(k2, (num_classes,), jnp.float32, -scale, scale)
    return params


def _pad2d(x, rows, cols, dtype):
    out = jnp.zeros((rows, cols), dtype)
    return out.at[: x.shape[0], : x.shape[1]].set(x.astype(dtype))


def pad_params(params, num_features, num_classes):
    """Zero-pad widths to lane-dense multiples of 128; padded lanes stay exactly zero."""
    f_pad = _round_up(num_features, LANE)
    h_pad = _round_up(params["conv_w"][0].shape[1], LANE)
    c_pad = _round_up(num_classes, LANE)
    conv_ws, conv_bs = [], []
    for i, (w, b) in enumerate(zip(params["conv_w"], params["conv_b"])):
        in_pad = f_pad if i == 0 else h_pad
        conv_ws.append(_pad2d(w, in_pad, h_pad, jnp.bfloat16))
        conv_bs.append(_pad2d(b.reshape(1, -1), 1, h_pad, jnp.float32))
    lin_w = _pad2d(params["lin_w"], h_pad, c_pad, jnp.bfloat16)
    lin_b = _pad2d(params["lin_b"].reshape(1, -1), 1, c_pad, jnp.float32)
    return conv_ws, conv_bs, lin_w, lin_b


def gcn_reference(params, xs, edge_indices):
    """Pure-JAX f32 reference matching the torch module (eval mode)."""
    outs = []
    for x, ei in zip(xs, edge_indices):
        a = build_norm_adj(ei, x.shape[0])
        h = x
        for w, b in zip(params["conv_w"], params["conv_b"]):
            h = jnp.maximum(a @ (h @ w) + b, 0.0)
        pooled = jnp.mean(h, axis=0)
        logits = pooled @ params["lin_w"] + params["lin_b"]
        outs.append(jax.nn.softmax(logits))
    return jnp.stack(outs)


# ---------------------------------- main --------------------------------------

if __name__ == "__main__":
    key = jax.random.PRNGKey(0)

    num_features = 8
    num_classes = 4
    hidden_dim = 64          # module hardcodes Linear(64, num_classes)
    nr_layers = 2
    nodes_per_graph = (10, 14)   # two graphs of different sizes -> exercises the pool mask

    xs, eis = [], []
    for n in nodes_per_graph:
        key, kx = jax.random.split(key)
        xs.append(jax.random.normal(kx, (n, num_features), jnp.float32))
        src, dst = [], []
        for i in range(n):          # undirected ring graph
            a, b = i, (i + 1) % n
            src += [a, b]
            dst += [b, a]
        eis.append(jnp.array([src, dst], dtype=jnp.int32))

    params = init_params(key, num_features, num_classes, hidden_dim, nr_layers)
    conv_ws, conv_bs, lin_w, lin_b = pad_params(params, num_features, num_classes)

    n_pad = _round_up(max(nodes_per_graph), LANE)
    f_pad = _round_up(num_features, LANE)
    a_blk, x_blk, counts = pack_graphs(xs, eis, n_pad, f_pad)

    out = gcn_forward(counts, a_blk, x_blk, conv_ws, conv_bs, lin_w, lin_b,
                      num_classes=num_classes)
    out = jax.block_until_ready(out)

    ref = gcn_reference(params, xs, eis)

    assert out.shape == (len(nodes_per_graph), num_classes)
    assert jnp.allclose(jnp.sum(out, axis=1), 1.0, atol=1e-5)   # softmax rows sum to 1
    assert jnp.allclose(out, ref, atol=3e-2), (out, ref)        # bf16 operands vs f32 reference
    print("KERNEL_OK")
</pallas_src>

<mosaic_0001>
module attributes {stable_mosaic.version = 11 : i64} {
  func.func @kernel(%arg0: i32, %arg1: memref<2xi32, #tpu.memory_space<smem>>, %arg2: memref<1x128x128xbf16, #tpu.memory_space<vmem>>, %arg3: memref<1x128x128xbf16, #tpu.memory_space<vmem>>, %arg4: memref<128x128xbf16, #tpu.memory_space<vmem>>, %arg5: memref<1x128xf32, #tpu.memory_space<vmem>>, %arg6: memref<128x128xbf16, #tpu.memory_space<vmem>>, %arg7: memref<1x128xf32, #tpu.memory_space<vmem>>, %arg8: memref<128x128xbf16, #tpu.memory_space<vmem>>, %arg9: memref<1x128xf32, #tpu.memory_space<vmem>>, %arg10: memref<1x1x128xf32, #tpu.memory_space<vmem>>) attributes {dimension_semantics = [#tpu.dimension_semantics<parallel>], iteration_bounds = array<i64: 2>, scalar_prefetch = 1 : i64, scratch_operands = 0 : i64, tpu.core_type = #tpu.core_type<tc>, window_params = [{transform_indices = @transform_0, window_bounds = array<i64: 1, 128, 128>}, {transform_indices = @transform_1, window_bounds = array<i64: 1, 128, 128>}, {pipeline_mode = #tpu.pipeline_mode<synchronous>, transform_indices = @transform_2, window_bounds = array<i64: 128, 128>}, {pipeline_mode = #tpu.pipeline_mode<synchronous>, transform_indices = @transform_3, window_bounds = array<i64: 1, 128>}, {pipeline_mode = #tpu.pipeline_mode<synchronous>, transform_indices = @transform_4, window_bounds = array<i64: 128, 128>}, {pipeline_mode = #tpu.pipeline_mode<synchronous>, transform_indices = @transform_5, window_bounds = array<i64: 1, 128>}, {pipeline_mode = #tpu.pipeline_mode<synchronous>, transform_indices = @transform_6, window_bounds = array<i64: 128, 128>}, {pipeline_mode = #tpu.pipeline_mode<synchronous>, transform_indices = @transform_7, window_bounds = array<i64: 1, 128>}, {transform_indices = @transform_8, window_bounds = array<i64: 1, 1, 128>}]} {
    %c0 = arith.constant 0 : index
    %c0_0 = arith.constant 0 : index
    %c0_1 = arith.constant 0 : index
    %0 = vector.load %arg2[%c0, %c0_0, %c0_1] : memref<1x128x128xbf16, #tpu.memory_space<vmem>>, vector<1x128x128xbf16>
    %1 = vector.shape_cast %0 : vector<1x128x128xbf16> to vector<128x128xbf16>
    %c0_2 = arith.constant 0 : index
    %c0_3 = arith.constant 0 : index
    %c0_4 = arith.constant 0 : index
    %2 = vector.load %arg3[%c0_2, %c0_3, %c0_4] : memref<1x128x128xbf16, #tpu.memory_space<vmem>>, vector<1x128x128xbf16>
    %3 = vector.shape_cast %2 : vector<1x128x128xbf16> to vector<128x128xbf16>
    %c0_5 = arith.constant 0 : index
    %c0_6 = arith.constant 0 : index
    %4 = vector.load %arg4[%c0_5, %c0_6] : memref<128x128xbf16, #tpu.memory_space<vmem>>, vector<128x128xbf16>
    %c0_7 = arith.constant 0 : index
    %c0_8 = arith.constant 0 : index
    %5 = vector.load %arg5[%c0_7, %c0_8] : memref<1x128xf32, #tpu.memory_space<vmem>>, vector<1x128xf32>
    %cst = arith.constant dense<0.000000e+00> : vector<128x128xf32>
    %6 = tpu.matmul %3, %4, %cst {dimension_numbers = #tpu.dot_dimension_numbers<[1], [0], [0], [1], [0, 0, 1, 1], [], []>} : vector<128x128xbf16>, vector<128x128xbf16>, vector<128x128xf32> -> vector<128x128xf32>
    %7 = arith.truncf %6 : vector<128x128xf32> to vector<128x128xbf16>
    %cst_9 = arith.constant dense<0.000000e+00> : vector<128x128xf32>
    %8 = tpu.matmul %1, %7, %cst_9 {dimension_numbers = #tpu.dot_dimension_numbers<[1], [0], [0], [1], [0, 0, 1, 1], [], []>} : vector<128x128xbf16>, vector<128x128xbf16>, vector<128x128xf32> -> vector<128x128xf32>
    %9 = vector.broadcast %5 : vector<1x128xf32> to vector<128x128xf32>
    %10 = arith.addf %8, %9 : vector<128x128xf32>
    %cst_10 = arith.constant 0.000000e+00 : f32
    %11 = vector.broadcast %cst_10 : f32 to vector<128x128xf32>
    %12 = arith.maximumf %10, %11 : vector<128x128xf32>
    %13 = arith.truncf %12 : vector<128x128xf32> to vector<128x128xbf16>
    %c0_11 = arith.constant 0 : index
    %c0_12 = arith.constant 0 : index
    %14 = vector.load %arg6[%c0_11, %c0_12] : memref<128x128xbf16, #tpu.memory_space<vmem>>, vector<128x128xbf16>
    %c0_13 = arith.constant 0 : index
    %c0_14 = arith.constant 0 : index
    %15 = vector.load %arg7[%c0_13, %c0_14] : memref<1x128xf32, #tpu.memory_space<vmem>>, vector<1x128xf32>
    %cst_15 = arith.constant dense<0.000000e+00> : vector<128x128xf32>
    %16 = tpu.matmul %13, %14, %cst_15 {dimension_numbers = #tpu.dot_dimension_numbers<[1], [0], [0], [1], [0, 0, 1, 1], [], []>} : vector<128x128xbf16>, vector<128x128xbf16>, vector<128x128xf32> -> vector<128x128xf32>
    %17 = arith.truncf %16 : vector<128x128xf32> to vector<128x128xbf16>
    %cst_16 = arith.constant dense<0.000000e+00> : vector<128x128xf32>
    %18 = tpu.matmul %1, %17, %cst_16 {dimension_numbers = #tpu.dot_dimension_numbers<[1], [0], [0], [1], [0, 0, 1, 1], [], []>} : vector<128x128xbf16>, vector<128x128xbf16>, vector<128x128xf32> -> vector<128x128xf32>
    %19 = vector.broadcast %15 : vector<1x128xf32> to vector<128x128xf32>
    %20 = arith.addf %18, %19 : vector<128x128xf32>
    %cst_17 = arith.constant 0.000000e+00 : f32
    %21 = vector.broadcast %cst_17 : f32 to vector<128x128xf32>
    %22 = arith.maximumf %20, %21 : vector<128x128xf32>
    %23 = arith.truncf %22 : vector<128x128xf32> to vector<128x128xbf16>
    %24 = arith.index_cast %arg0 : i32 to index
    %25 = memref.load %arg1[%24] : memref<2xi32, #tpu.memory_space<smem>>
    %c1_i32 = arith.constant 1 : i32
    %26 = arith.maxsi %25, %c1_i32 : i32
    %27 = tpu.iota {dimensions = array<i32: 0>} : vector<128x1xi32>
    %28 = vector.broadcast %26 : i32 to vector<128x1xi32>
    %29 = arith.cmpi slt, %27, %28 : vector<128x1xi32>
    %30 = arith.extui %29 : vector<128x1xi1> to vector<128x1xi32>
    %31 = arith.sitofp %30 : vector<128x1xi32> to vector<128x1xf32>
    %32 = arith.extf %23 : vector<128x128xbf16> to vector<128x128xf32>
    %33 = vector.broadcast %31 : vector<128x1xf32> to vector<128x128xf32>
    %34 = arith.mulf %32, %33 : vector<128x128xf32>
    %cst_18 = arith.constant dense<0.000000e+00> : vector<128xf32>
    %35 = vector.multi_reduction <add>, %34, %cst_18 [0] : vector<128x128xf32> to vector<128xf32>
    %36 = vector.shape_cast %35 : vector<128xf32> to vector<1x128xf32>
    %37 = arith.sitofp %26 : i32 to f32
    %38 = vector.broadcast %37 : f32 to vector<1x128xf32>
    %39 = arith.divf %36, %38 : vector<1x128xf32>
    %40 = arith.truncf %39 : vector<1x128xf32> to vector<1x128xbf16>
    %c0_19 = arith.constant 0 : index
    %c0_20 = arith.constant 0 : index
    %41 = vector.load %arg8[%c0_19, %c0_20] : memref<128x128xbf16, #tpu.memory_space<vmem>>, vector<128x128xbf16>
    %cst_21 = arith.constant dense<0.000000e+00> : vector<1x128xf32>
    %42 = tpu.matmul %40, %41, %cst_21 {dimension_numbers = #tpu.dot_dimension_numbers<[1], [0], [0], [1], [0, 0, 1, 1], [], []>} : vector<1x128xbf16>, vector<128x128xbf16>, vector<1x128xf32> -> vector<1x128xf32>
    %c0_22 = arith.constant 0 : index
    %c0_23 = arith.constant 0 : index
    %43 = vector.load %arg9[%c0_22, %c0_23] : memref<1x128xf32, #tpu.memory_space<vmem>>, vector<1x128xf32>
    %44 = arith.addf %42, %43 : vector<1x128xf32>
    %45 = tpu.iota {dimensions = array<i32: 1>} : vector<1x128xi32>
    %c4_i32 = arith.constant 4 : i32
    %46 = vector.broadcast %c4_i32 : i32 to vector<1x128xi32>
    %47 = arith.cmpi slt, %45, %46 : vector<1x128xi32>
    %cst_24 = arith.constant -1.000000e+30 : f32
    %48 = vector.broadcast %cst_24 : f32 to vector<1x128xf32>
    %49 = arith.select %47, %44, %48 : vector<1x128xi1>, vector<1x128xf32>
    %cst_25 = arith.constant dense<0xFF800000> : vector<1xf32>
    %50 = vector.multi_reduction <maximumf>, %49, %cst_25 [1] : vector<1x128xf32> to vector<1xf32>
    %51 = vector.shape_cast %50 : vector<1xf32> to vector<1x1xf32>
    %52 = vector.broadcast %51 : vector<1x1xf32> to vector<1x128xf32>
    %53 = arith.subf %49, %52 : vector<1x128xf32>
    %54 = math.exp %53 : vector<1x128xf32>
    %cst_26 = arith.constant dense<0.000000e+00> : vector<1xf32>
    %55 = vector.multi_reduction <add>, %54, %cst_26 [1] : vector<1x128xf32> to vector<1xf32>
    %56 = vector.shape_cast %55 : vector<1xf32> to vector<1x1xf32>
    %57 = vector.broadcast %56 : vector<1x1xf32> to vector<1x128xf32>
    %58 = arith.divf %54, %57 : vector<1x128xf32>
    %c0_27 = arith.constant 0 : index
    %c0_28 = arith.constant 0 : index
    %c0_29 = arith.constant 0 : index
    %59 = vector.load %arg10[%c0_27, %c0_28, %c0_29] : memref<1x1x128xf32, #tpu.memory_space<vmem>>, vector<1x1x128xf32>
    %60 = vector.shape_cast %59 : vector<1x1x128xf32> to vector<1x128xf32>
    %61 = vector.shape_cast %58 : vector<1x128xf32> to vector<1x1x128xf32>
    tpu.vector_store %arg10[%c0_27, %c0_28, %c0_29], %61 {strides = array<i32>} : memref<1x1x128xf32, #tpu.memory_space<vmem>>, vector<1x1x128xf32>,
    return
  }
  func.func @transform_0(%arg0: i32, %arg1: memref<2xi32, #tpu.memory_space<smem>>) -> (i32, i32, i32) {
    %c0_i32 = arith.constant 0 : i32
    %c0_i32_0 = arith.constant 0 : i32
    %c0_i32_1 = arith.constant 0 : i32
    return %arg0, %c0_i32, %c0_i32_0 : i32, i32, i32
  }
  func.func @transform_1(%arg0: i32, %arg1: memref<2xi32, #tpu.memory_space<smem>>) -> (i32, i32, i32) {
    %c0_i32 = arith.constant 0 : i32
    %c0_i32_0 = arith.constant 0 : i32
    %c0_i32_1 = arith.constant 0 : i32
    return %arg0, %c0_i32, %c0_i32_0 : i32, i32, i32
  }
  func.func @transform_2(%arg0: i32, %arg1: memref<2xi32, #tpu.memory_space<smem>>) -> (i32, i32) {
    %c0_i32 = arith.constant 0 : i32
    %c0_i32_0 = arith.constant 0 : i32
    %c0_i32_1 = arith.constant 0 : i32
    return %c0_i32, %c0_i32_0 : i32, i32
  }
  func.func @transform_3(%arg0: i32, %arg1: memref<2xi32, #tpu.memory_space<smem>>) -> (i32, i32) {
    %c0_i32 = arith.constant 0 : i32
    %c0_i32_0 = arith.constant 0 : i32
    %c0_i32_1 = arith.constant 0 : i32
    return %c0_i32, %c0_i32_0 : i32, i32
  }
  func.func @transform_4(%arg0: i32, %arg1: memref<2xi32, #tpu.memory_space<smem>>) -> (i32, i32) {
    %c0_i32 = arith.constant 0 : i32
    %c0_i32_0 = arith.constant 0 : i32
    %c0_i32_1 = arith.constant 0 : i32
    return %c0_i32, %c0_i32_0 : i32, i32
  }
  func.func @transform_5(%arg0: i32, %arg1: memref<2xi32, #tpu.memory_space<smem>>) -> (i32, i32) {
    %c0_i32 = arith.constant 0 : i32
    %c0_i32_0 = arith.constant 0 : i32
    %c0_i32_1 = arith.constant 0 : i32
    return %c0_i32, %c0_i32_0 : i32, i32
  }
  func.func @transform_6(%arg0: i32, %arg1: memref<2xi32, #tpu.memory_space<smem>>) -> (i32, i32) {
    %c0_i32 = arith.constant 0 : i32
    %c0_i32_0 = arith.constant 0 : i32
    %c0_i32_1 = arith.constant 0 : i32
    return %c0_i32, %c0_i32_0 : i32, i32
  }
  func.func @transform_7(%arg0: i32, %arg1: memref<2xi32, #tpu.memory_space<smem>>) -> (i32, i32) {
    %c0_i32 = arith.constant 0 : i32
    %c0_i32_0 = arith.constant 0 : i32
    %c0_i32_1 = arith.constant 0 : i32
    return %c0_i32, %c0_i32_0 : i32, i32
  }
  func.func @transform_8(%arg0: i32, %arg1: memref<2xi32, #tpu.memory_space<smem>>) -> (i32, i32, i32) {
    %c0_i32 = arith.constant 0 : i32
    %c0_i32_0 = arith.constant 0 : i32
    %c0_i32_1 = arith.constant 0 : i32
    return %arg0, %c0_i32, %c0_i32_0 : i32, i32, i32
  }
}

</mosaic_0001>

<llo_original>
// kernel: gcn_forward.1
$region0: #{gcn_forward.1}
  #allocation0 [shape = 'u32[]', space=smem, size = 0x4, offset = 0x4, fixed_abs, tag = 'smem constant byte address 0x4 - core index']
  #allocation1 [shape = 'u32[72,128]{1,0:T(1,128)}', space=vmem, size = 0x9000, scoped, tag = 'internal scratch']
  #allocation2 [shape = 's32[1]{0}', space=sflag, size = 0x4, scoped, tag = 'scoped memory for gcn_forward.1']
  #allocation3 [shape = 'u8[512]{0}', space=smem, size = 0x200, scoped, tag = 'prefetched SMEM operand 0']
  %s0 = inlined_call_operand.hbm [shape: s32[2], index: 0, kind: input, shape index: {}]
  %s1 = inlined_call_operand.hbm [shape: bf16[2,128,128], index: 1, kind: input, shape index: {}]
  %s2 = inlined_call_operand.hbm [shape: bf16[2,128,128], index: 2, kind: input, shape index: {}]
  %s3 = inlined_call_operand.hbm [shape: bf16[128,128], index: 3, kind: input, shape index: {}]
  %s4 = inlined_call_operand.vmem [shape: f32[1,128], index: 4, kind: input, shape index: {}]
  %s5 = inlined_call_operand.hbm [shape: bf16[128,128], index: 5, kind: input, shape index: {}]
  %s6 = inlined_call_operand.vmem [shape: f32[1,128], index: 6, kind: input, shape index: {}]
  %s7 = inlined_call_operand.hbm [shape: bf16[128,128], index: 7, kind: input, shape index: {}]
  %s8 = inlined_call_operand.vmem [shape: f32[1,128], index: 8, kind: input, shape index: {}]
  %s9 = inlined_call_operand.hbm [shape: f32[2,1,128], index: 9, kind: output, shape index: {}]
  %s10 = sld [smem:[#allocation0]]
  $region85: #{gcn_forward.1} parent=0
    _
  %s12 = ssub.s32 1, %s10
  %s13 = scalar_select 0, %s12, %s10
  %s15 = sshll.u32 %s0, 4
  %s16 = int_to_ptr.hbm [resolvable:$true] %s15
  %18 = dma.hbm_to_smem %s16, 16, [#allocation3], [#allocation2]
  %20 = dma.done [#allocation2], 16
  %21 = sfence
  $region1: #{gcn_forward.1} parent=0
    #allocation4 [shape = 'u8[65536]{0}', space=vmem, size = 0x10000, scoped, tag = 'input window, operand 1']
    #allocation5 [shape = 's32[2]{0}', space=sflag, size = 0x8, scoped, tag = 'scoped memory for gcn_forward.1']
    #allocation6 [shape = 's32[2]{0}', space=sflag, size = 0x8, scoped, tag = 'scoped memory for gcn_forward.1']
    #allocation7 [shape = 'u8[65536]{0}', space=vmem, size = 0x10000, scoped, tag = 'input window, operand 2']
    #allocation8 [shape = 's32[2]{0}', space=sflag, size = 0x8, scoped, tag = 'scoped memory for gcn_forward.1']
    #allocation9 [shape = 'u8[32768]{0}', space=vmem, size = 0x8000, scoped, tag = 'input window, operand 3, single buffered']
    #allocation10 [shape = 'u8[32768]{0}', space=vmem, size = 0x8000, scoped, tag = 'input window, operand 5, single buffered']
    #allocation11 [shape = 's32[1]{0}', space=sflag, size = 0x4, scoped, tag = 'scoped memory for gcn_forward.1']
    #allocation12 [shape = 'u8[32768]{0}', space=vmem, size = 0x8000, scoped, tag = 'input window, operand 7, single buffered']
    #allocation13 [shape = 'u8[1024]{0}', space=vmem, size = 0x400, scoped, tag = 'output window, operand 0']
    %22 = vsyncpa [#allocation5], 0
    %s23 = scalar_lea.sflag [#allocation5], 1
    %24 = vsyncpa %s23, 0
    %25 = vsyncpa [#allocation8], 0
    %s26 = scalar_lea.sflag [#allocation8], 1
    %27 = vsyncpa %s26, 0
    %28 = vsyncpa [#allocation11], 0
    %29 = vsyncpa [#allocation6], 0
    %s30 = scalar_lea.sflag [#allocation6], 1
    %31 = vsyncpa %s30, 0
    loop: start=0, step=1, limit=4
    $region2: #{gcn_forward.1} parent=1 // loop_pre_header
      _
    $region3: #{gcn_forward.1} parent=1 // loop_header
      %s33 = sphi 0, %s37
      %p34 = scmp.ge.s32.totalorder %s33, 4
      %s43 = sphi 0, %s45
      %s46 = sphi 0, %s43
      %s47 = sphi 0, %s46
      %s63 = sphi 0, %s47
      %s69 = sphi 0, %s71
      %s72 = sphi 0, %s69
      %s73 = sphi 0, %s72
      %s89 = sphi 0, %s73
      %s93 = sphi 0, %s93
      %s95 = sphi 0, %s93
      %s96 = sphi 0, %s95
      %s110 = sphi 0, %s96
      %s114 = sphi 0, %s114
      %s116 = sphi 0, %s114
      %s117 = sphi 0, %s116
      %s131 = sphi 0, %s117
      %s135 = sphi 0, %s135
      %s137 = sphi 0, %s135
      %s138 = sphi 0, %s137
      %s152 = sphi 0, %s138
      %s156 = sphi 0, %s156
      %s158 = sphi 0, %s156
      %s159 = sphi 0, %s158
      %s173 = sphi 0, %s159
      %s177 = sphi 0, %s177
      %s179 = sphi 0, %s177
      %s180 = sphi 0, %s179
      %s194 = sphi 0, %s180
      %s198 = sphi 0, %s198
      %s200 = sphi 0, %s198
      %s201 = sphi 0, %s200
      %s215 = sphi 0, %s201
      %s221 = sphi 0, %s223
      %s224 = sphi 0, %s221
      %s225 = sphi 0, %s224
      %s241 = sphi 0, %s225
    $region4: #{gcn_forward.1} parent=1 // loop_header_branch
      %36 = sbr.rel (%p34) target = $region8
    $region5: #{gcn_forward.1} parent=1 // loop_body
      %s38 = ssub.s32 %s33, 1
      %s39 = ssub.s32 %s33, 2
      %s40 = sadd.s32 %s33, 1
      %s41 = ssub.s32 %s33, %s40
      %p42 = scmp.eq.s32.totalorder %s41, 0
      %s44 = sadd.s32 %s43, 1
      %s45 = scalar_select %p42, %s43, %s44
      %p48 = pneg %p42
      %p49 = scmp.eq.s32.totalorder %s33, 1
      %p50 = por %p48, %p49
      %p51 = scmp.ne.s32.totalorder %s43, %s46
      %p52 = scmp.eq.s32.totalorder %s33, 0
      %p53 = por %p51, %p52
      %p54 = scmp.ne.s32.totalorder %s43, %s46
      %p55 = scmp.eq.s32.totalorder %s38, 1
      %p56 = por %p54, %p55
      %p57 = scmp.ne.s32.totalorder %s46, %s47
      %p58 = scmp.eq.s32.totalorder %s38, 0
      %p59 = por %p57, %p58
      %p60 = scmp.ne.s32.totalorder %s46, %s47
      %p61 = scmp.eq.s32.totalorder %s39, 1
      %p62 = por %p60, %p61
      %p64 = scmp.ne.s32.totalorder %s47, %s63
      %p65 = scmp.eq.s32.totalorder %s39, 0
      %p66 = por %p64, %p65
      %s67 = ssub.s32 %s33, %s40
      %p68 = scmp.eq.s32.totalorder %s67, 0
      %s70 = sadd.s32 %s69, 1
      %s71 = scalar_select %p68, %s69, %s70
      %p74 = pneg %p68
      %p75 = scmp.eq.s32.totalorder %s33, 1
      %p76 = por %p74, %p75
      %p77 = scmp.ne.s32.totalorder %s69, %s72
      %p78 = scmp.eq.s32.totalorder %s33, 0
      %p79 = por %p77, %p78
      %p80 = scmp.ne.s32.totalorder %s69, %s72
      %p81 = scmp.eq.s32.totalorder %s38, 1
      %p82 = por %p80, %p81
      %p83 = scmp.ne.s32.totalorder %s72, %s73
      %p84 = scmp.eq.s32.totalorder %s38, 0
      %p85 = por %p83, %p84
      %p86 = scmp.ne.s32.totalorder %s72, %s73
      %p87 = scmp.eq.s32.totalorder %s39, 1
      %p88 = por %p86, %p87
      %p90 = scmp.ne.s32.totalorder %s73, %s89
      %p91 = scmp.eq.s32.totalorder %s39, 0
      %p92 = por %p90, %p91
      %s94 = sadd.s32 %s93, 1
      %p97 = scmp.eq.s32.totalorder %s33, 1
      %p98 = scmp.ne.s32.totalorder %s93, %s95
      %p99 = scmp.eq.s32.totalorder %s33, 0
      %p100 = por %p98, %p99
      %p101 = scmp.ne.s32.totalorder %s93, %s95
      %p102 = scmp.eq.s32.totalorder %s38, 1
      %p103 = por %p101, %p102
      %p104 = scmp.ne.s32.totalorder %s95, %s96
      %p105 = scmp.eq.s32.totalorder %s38, 0
      %p106 = por %p104, %p105
      %p107 = scmp.ne.s32.totalorder %s95, %s96
      %p108 = scmp.eq.s32.totalorder %s39, 1
      %p109 = por %p107, %p108
      %p111 = scmp.ne.s32.totalorder %s96, %s110
      %p112 = scmp.eq.s32.totalorder %s39, 0
      %p113 = por %p111, %p112
      %s115 = sadd.s32 %s114, 1
      %p118 = scmp.eq.s32.totalorder %s33, 1
      %p119 = scmp.ne.s32.totalorder %s114, %s116
      %p120 = scmp.eq.s32.totalorder %s33, 0
      %p121 = por %p119, %p120
      %p122 = scmp.ne.s32.totalorder %s114, %s116
      %p123 = scmp.eq.s32.totalorder %s38, 1
      %p124 = por %p122, %p123
      %p125 = scmp.ne.s32.totalorder %s116, %s117
      %p126 = scmp.eq.s32.totalorder %s38, 0
      %p127 = por %p125, %p126
      %p128 = scmp.ne.s32.totalorder %s116, %s117
      %p129 = scmp.eq.s32.totalorder %s39, 1
      %p130 = por %p128, %p129
      %p132 = scmp.ne.s32.totalorder %s117, %s131
      %p133 = scmp.eq.s32.totalorder %s39, 0
      %p134 = por %p132, %p133
      %s136 = sadd.s32 %s135, 1
      %p139 = scmp.eq.s32.totalorder %s33, 1
      %p140 = scmp.ne.s32.totalorder %s135, %s137
      %p141 = scmp.eq.s32.totalorder %s33, 0
      %p142 = por %p140, %p141
      %p143 = scmp.ne.s32.totalorder %s135, %s137
      %p144 = scmp.eq.s32.totalorder %s38, 1
      %p145 = por %p143, %p144
      %p146 = scmp.ne.s32.totalorder %s137, %s138
      %p147 = scmp.eq.s32.totalorder %s38, 0
      %p148 = por %p146, %p147
      %p149 = scmp.ne.s32.totalorder %s137, %s138
      %p150 = scmp.eq.s32.totalorder %s39, 1
      %p151 = por %p149, %p150
      %p153 = scmp.ne.s32.totalorder %s138, %s152
      %p154 = scmp.eq.s32.totalorder %s39, 0
      %p155 = por %p153, %p154
      %s157 = sadd.s32 %s156, 1
      %p160 = scmp.eq.s32.totalorder %s33, 1
      %p161 = scmp.ne.s32.totalorder %s156, %s158
      %p162 = scmp.eq.s32.totalorder %s33, 0
      %p163 = por %p161, %p162
      %p164 = scmp.ne.s32.totalorder %s156, %s158
      %p165 = scmp.eq.s32.totalorder %s38, 1
      %p166 = por %p164, %p165
      %p167 = scmp.ne.s32.totalorder %s158, %s159
      %p168 = scmp.eq.s32.totalorder %s38, 0
      %p169 = por %p167, %p168
      %p170 = scmp.ne.s32.totalorder %s158, %s159
      %p171 = scmp.eq.s32.totalorder %s39, 1
      %p172 = por %p170, %p171
      %p174 = scmp.ne.s32.totalorder %s159, %s173
      %p175 = scmp.eq.s32.totalorder %s39, 0
      %p176 = por %p174, %p175
      %s178 = sadd.s32 %s177, 1
      %p181 = scmp.eq.s32.totalorder %s33, 1
      %p182 = scmp.ne.s32.totalorder %s177, %s179
      %p183 = scmp.eq.s32.totalorder %s33, 0
      %p184 = por %p182, %p183
      %p185 = scmp.ne.s32.totalorder %s177, %s179
      %p186 = scmp.eq.s32.totalorder %s38, 1
      %p187 = por %p185, %p186
      %p188 = scmp.ne.s32.totalorder %s179, %s180
      %p189 = scmp.eq.s32.totalorder %s38, 0
      %p190 = por %p188, %p189
      %p191 = scmp.ne.s32.totalorder %s179, %s180
      %p192 = scmp.eq.s32.totalorder %s39, 1
      %p193 = por %p191, %p192
      %p195 = scmp.ne.s32.totalorder %s180, %s194
      %p196 = scmp.eq.s32.totalorder %s39, 0
      %p197 = por %p195, %p196
      %s199 = sadd.s32 %s198, 1
      %p202 = scmp.eq.s32.totalorder %s33, 1
      %p203 = scmp.ne.s32.totalorder %s198, %s200
      %p204 = scmp.eq.s32.totalorder %s33, 0
      %p205 = por %p203, %p204
      %p206 = scmp.ne.s32.totalorder %s198, %s200
      %p207 = scmp.eq.s32.totalorder %s38, 1
      %p208 = por %p206, %p207
      %p209 = scmp.ne.s32.totalorder %s200, %s201
      %p210 = scmp.eq.s32.totalorder %s38, 0
      %p211 = por %p209, %p210
      %p212 = scmp.ne.s32.totalorder %s200, %s201
      %p213 = scmp.eq.s32.totalorder %s39, 1
      %p214 = por %p212, %p213
      %p216 = scmp.ne.s32.totalorder %s201, %s215
      %p217 = scmp.eq.s32.totalorder %s39, 0
      %p218 = por %p216, %p217
      %s219 = ssub.s32 %s33, %s40
      %p220 = scmp.eq.s32.totalorder %s219, 0
      %s222 = sadd.s32 %s221, 1
      %s223 = scalar_select %p220, %s221, %s222
      %p226 = pneg %p220
      %p227 = scmp.eq.s32.totalorder %s33, 1
      %p228 = por %p226, %p227
      %p229 = scmp.ne.s32.totalorder %s221, %s224
      %p230 = scmp.eq.s32.totalorder %s33, 0
      %p231 = por %p229, %p230
      %p232 = scmp.ne.s32.totalorder %s221, %s224
      %p233 = scmp.eq.s32.totalorder %s38, 1
      %p234 = por %p232, %p233
      %p235 = scmp.ne.s32.totalorder %s224, %s225
      %p236 = scmp.eq.s32.totalorder %s38, 0
      %p237 = por %p235, %p236
      %p238 = scmp.ne.s32.totalorder %s224, %s225
      %p239 = scmp.eq.s32.totalorder %s39, 1
      %p240 = por %p238, %p239
      %p242 = scmp.ne.s32.totalorder %s225, %s241
      %p243 = scmp.eq.s32.totalorder %s39, 0
      %p244 = por %p242, %p243
      %p245 = scmp.le.s32.totalorder 1, %s33
      %p246 = scmp.lt.s32.totalorder %s33, 3
      %p247 = pnand %p245, %p246
      %p248 = pneg %p247
      // Predicated region
      $region9: #{gcn_forward.1} parent=5 // pred_check
        _
      $region10: #{gcn_forward.1} parent=5 // pred_check_branch
        %250 = sbr.rel (%p247) target = $region12
      $region11: #{gcn_forward.1} parent=5 // pred_region
        %s251 = ssub.s32 %s33, 1
        // Predicated region
        $region13: #{gcn_forward.1} parent=11 // pred_check
          %p252 = pneg %p106
        $region14: #{gcn_forward.1} parent=11 // pred_check_branch
          %254 = sbr.rel (%p252) target = $region16
        $region15: #{gcn_forward.1} parent=11 // pred_region
          %256 = vsyncadd [#allocation8], 0
          %s257 = sshll.u32 %s3, 4
          %s258 = int_to_ptr.hbm [resolvable:$true] %s257
          %s259 = sshll.u32 [#allocation9], 4
          %s260 = int_to_ptr.vmem [resolvable:$true] %s259
          %265 = dma.hbm_to_vmem [thread:$0]  %s258, 1024, %s260, [#allocation8], 64, 64, 4
        $region16: #{gcn_forward.1} parent=11 // pred_fallthru
          _
        // Predicated region
        $region17: #{gcn_forward.1} parent=11 // pred_check
          %p266 = pneg %p127
        $region18: #{gcn_forward.1} parent=11 // pred_check_branch
          %268 = sbr.rel (%p266) target = $region20
        $region19: #{gcn_forward.1} parent=11 // pred_region
          _
        $region20: #{gcn_forward.1} parent=11 // pred_fallthru
          _
        // Predicated region
        $region21: #{gcn_forward.1} parent=11 // pred_check
          %p269 = pneg %p148
        $region22: #{gcn_forward.1} parent=11 // pred_check_branch
          %271 = sbr.rel (%p269) target = $region24
        $region23: #{gcn_forward.1} parent=11 // pred_region
          %273 = vsyncadd [#allocation11], 0
          %s274 = sshll.u32 %s5, 4
          %s275 = int_to_ptr.hbm [resolvable:$true] %s274
          %s276 = sshll.u32 [#allocation10], 4
          %s277 = int_to_ptr.vmem [resolvable:$true] %s276
          %282 = dma.hbm_to_vmem [thread:$0]  %s275, 1024, %s277, [#allocation11], 64, 64, 4
        $region24: #{gcn_forward.1} parent=11 // pred_fallthru
          _
        // Predicated region
        $region25: #{gcn_forward.1} parent=11 // pred_check
          %p283 = pneg %p169
        $region26: #{gcn_forward.1} parent=11 // pred_check_branch
          %285 = sbr.rel (%p283) target = $region28
        $region27: #{gcn_forward.1} parent=11 // pred_region
          _
        $region28: #{gcn_forward.1} parent=11 // pred_fallthru
          _
        // Predicated region
        $region29: #{gcn_forward.1} parent=11 // pred_check
          %p286 = pneg %p190
        $region30: #{gcn_forward.1} parent=11 // pred_check_branch
          %288 = sbr.rel (%p286) target = $region32
        $region31: #{gcn_forward.1} parent=11 // pred_region
          %290 = vsyncadd [#allocation11], 0
          %s291 = sshll.u32 %s7, 4
          %s292 = int_to_ptr.hbm [resolvable:$true] %s291
          %s293 = sshll.u32 [#allocation12], 4
          %s294 = int_to_ptr.vmem [resolvable:$true] %s293
          %299 = dma.hbm_to_vmem [thread:$0]  %s292, 1024, %s294, [#allocation11], 64, 64, 4
        $region32: #{gcn_forward.1} parent=11 // pred_fallthru
          _
        // Predicated region
        $region33: #{gcn_forward.1} parent=11 // pred_check
          %p300 = pneg %p211
        $region34: #{gcn_forward.1} parent=11 // pred_check_branch
          %302 = sbr.rel (%p300) target = $region36
        $region35: #{gcn_forward.1} parent=11 // pred_region
          _
        $region36: #{gcn_forward.1} parent=11 // pred_fallthru
          _
      $region12: #{gcn_forward.1} parent=5 // pred_fallthru
        _
      %p303 = scmp.lt.s32.totalorder %s33, 2
      // Predicated region
      $region37: #{gcn_forward.1} parent=5 // pred_check
        %p304 = pneg %p303
      $region38: #{gcn_forward.1} parent=5 // pred_check_branch
        %306 = sbr.rel (%p304) target = $region40
      $region39: #{gcn_forward.1} parent=5 // pred_region
        // Predicated region
        $region41: #{gcn_forward.1} parent=39 // pred_check
          %p307 = pneg %p53
        $region42: #{gcn_forward.1} parent=39 // pred_check_branch
          %309 = sbr.rel (%p307) target = $region44
        $region43: #{gcn_forward.1} parent=39 // pred_region
          %s310 = sand.u32 %s43, 1
          %s311 = scalar_lea.sflag [#allocation5], %s310
          %s312 = sand.u32 %s43, 1
          %s313 = smul.addr %s312, 64
          %s314 = scalar_lea.vmem [#allocation4], %s313
          %316 = vsyncadd %s311, 0
          %s317 = smul.addr %s33, 16
          %s318 = smul.addr %s317, 4
          %s319 = scalar_lea.hbm %s1, %s318
          %s320 = sshll.u32 %s319, 4
          %s321 = int_to_ptr.hbm [resolvable:$true] %s320
          %s322 = sshll.u32 %s314, 4
          %s323 = int_to_ptr.vmem [resolvable:$true] %s322
          %328 = dma.hbm_to_vmem [thread:$0]  %s321, 1024, %s323, %s311, 64, 64, 4
        $region44: #{gcn_forward.1} parent=39 // pred_fallthru
          _
        // Predicated region
        $region45: #{gcn_forward.1} parent=39 // pred_check
          %p329 = pneg %p79
        $region46: #{gcn_forward.1} parent=39 // pred_check_branch
          %331 = sbr.rel (%p329) target = $region48
        $region47: #{gcn_forward.1} parent=39 // pred_region
          %s332 = sand.u32 %s33, 1
          %s333 = scalar_lea.sflag [#allocation8], %s332
          %s334 = sand.u32 %s69, 1
          %s335 = smul.addr %s334, 64
          %s336 = scalar_lea.vmem [#allocation7], %s335
          %338 = vsyncadd %s333, 0
          %s339 = smul.addr %s33, 16
          %s340 = smul.addr %s339, 4
          %s341 = scalar_lea.hbm %s2, %s340
          %s342 = sshll.u32 %s341, 4
          %s343 = int_to_ptr.hbm [resolvable:$true] %s342
          %s344 = sshll.u32 %s336, 4
          %s345 = int_to_ptr.vmem [resolvable:$true] %s344
          %350 = dma.hbm_to_vmem [thread:$0]  %s343, 1024, %s345, %s333, 64, 64, 4
        $region48: #{gcn_forward.1} parent=39 // pred_fallthru
          _
      $region40: #{gcn_forward.1} parent=5 // pred_fallthru
        _
      %p351 = scmp.le.s32.totalorder 1, %s33
      %p352 = scmp.lt.s32.totalorder %s33, 3
      %p353 = pnand %p351, %p352
      %p354 = pneg %p353
      // Predicated region
      $region49: #{gcn_forward.1} parent=5 // pred_check
        _
      $region50: #{gcn_forward.1} parent=5 // pred_check_branch
        %356 = sbr.rel (%p353) target = $region52
      $region51: #{gcn_forward.1} parent=5 // pred_region
        %s357 = ssub.s32 %s33, 1
        %s358 = sand.u32 %s46, 1
        %s359 = scalar_lea.sflag [#allocation5], %s358
        %s360 = sand.u32 %s46, 1
        %s361 = smul.addr %s360, 64
        %s362 = scalar_lea.vmem [#allocation4], %s361
        // Predicated region
        $region53: #{gcn_forward.1} parent=51 // pred_check
          %p363 = pneg %p59
        $region54: #{gcn_forward.1} parent=51 // pred_check_branch
          %365 = sbr.rel (%p363) target = $region56
        $region55: #{gcn_forward.1} parent=51 // pred_region
          %367 = dma.done %s359, 1024
        $region56: #{gcn_forward.1} parent=51 // pred_fallthru
          _
        %s368 = sand.u32 %s38, 1
        %s369 = scalar_lea.sflag [#allocation8], %s368
        %s370 = sand.u32 %s72, 1
        %s371 = smul.addr %s370, 64
        %s372 = scalar_lea.vmem [#allocation7], %s371
        // Predicated region
        $region57: #{gcn_forward.1} parent=51 // pred_check
          %p373 = pneg %p85
        $region58: #{gcn_forward.1} parent=51 // pred_check_branch
          %375 = sbr.rel (%p373) target = $region60
        $region59: #{gcn_forward.1} parent=51 // pred_region
          %377 = dma.done %s369, 1024
        $region60: #{gcn_forward.1} parent=51 // pred_fallthru
          _
        // Predicated region
        $region61: #{gcn_forward.1} parent=51 // pred_check
          %p378 = pneg %p106
        $region62: #{gcn_forward.1} parent=51 // pred_check_branch
          %380 = sbr.rel (%p378) target = $region64
        $region63: #{gcn_forward.1} parent=51 // pred_region
          %382 = dma.done [#allocation8], 1024
        $region64: #{gcn_forward.1} parent=51 // pred_fallthru
          _
        // Predicated region
        $region65: #{gcn_forward.1} parent=51 // pred_check
          %p383 = pneg %p148
        $region66: #{gcn_forward.1} parent=51 // pred_check_branch
          %385 = sbr.rel (%p383) target = $region68
        $region67: #{gcn_forward.1} parent=51 // pred_region
          %387 = dma.done [#allocation11], 1024
        $region68: #{gcn_forward.1} parent=51 // pred_fallthru
          _
        // Predicated region
        $region69: #{gcn_forward.1} parent=51 // pred_check
          %p388 = pneg %p190
        $region70: #{gcn_forward.1} parent=51 // pred_check_branch
          %390 = sbr.rel (%p388) target = $region72
        $region71: #{gcn_forward.1} parent=51 // pred_region
          %392 = dma.done [#allocation11], 1024
        $region72: #{gcn_forward.1} parent=51 // pred_fallthru
          _
        %s393 = sand.u32 %s46, 1
        %s394 = scalar_lea.sflag [#allocation5], %s393
        %s395 = sand.u32 %s46, 1
        %s396 = smul.addr %s395, 64
        %s397 = scalar_lea.vmem [#allocation4], %s396
        %p398 = pneg %p59
        %p399 = pneg %p56
        %s400 = sand.u32 %s38, 1
        %s401 = scalar_lea.sflag [#allocation8], %s400
        %s402 = sand.u32 %s72, 1
        %s403 = smul.addr %s402, 64
        %s404 = scalar_lea.vmem [#allocation7], %s403
        %p405 = pneg %p85
        %p406 = pneg %p82
        %p407 = pneg %p106
        %p408 = pneg %p103
        %p409 = pneg %p127
        %p410 = pneg %p124
        %p411 = pneg %p148
        %p412 = pneg %p145
        %p413 = pneg %p169
        %p414 = pneg %p166
        %p415 = pneg %p190
        %p416 = pneg %p187
        %p417 = pneg %p211
        %p418 = pneg %p208
        %p419 = pneg %p237
        %p420 = pneg %p234
        %s421 = sand.u32 %s224, 1
        %s422 = scalar_lea.sflag [#allocation6], %s421
        %s423 = sand.u32 %s224, 1
        %s424 = scalar_lea.vmem [#allocation13], %s423
        %v425 = vld [vmem:[%s362] sm:$0xf]
        %v426 = vld [vmem:[%s362 + $0x4] sm:$0xf]
        %v427 = vld [vmem:[%s362 + $0x8] sm:$0xf]
        %v428 = vld [vmem:[%s362 + $0xc] sm:$0xf]
        %v429 = vld [vmem:[%s362 + $0x10] sm:$0xf]
        %v430 = vld [vmem:[%s362 + $0x14] sm:$0xf]
        %v431 = vld [vmem:[%s362 + $0x18] sm:$0xf]
        %v432 = vld [vmem:[%s362 + $0x1c] sm:$0xf]
        %v433 = vld [vmem:[%s362 + $0x20] sm:$0xf]
        %v434 = vld [vmem:[%s362 + $0x24] sm:$0xf]
        %v435 = vld [vmem:[%s362 + $0x28] sm:$0xf]
        %v436 = vld [vmem:[%s362 + $0x2c] sm:$0xf]
        %v437 = vld [vmem:[%s362 + $0x30] sm:$0xf]
        %v438 = vld [vmem:[%s362 + $0x34] sm:$0xf]
        %v439 = vld [vmem:[%s362 + $0x38] sm:$0xf]
        %v440 = vld [vmem:[%s362 + $0x3c] sm:$0xf]
        %v441 = vld [vmem:[%s372] sm:$0xf]
        %v442 = vld [vmem:[%s372 + $0x4] sm:$0xf]
        %v443 = vld [vmem:[%s372 + $0x8] sm:$0xf]
        %v444 = vld [vmem:[%s372 + $0xc] sm:$0xf]
        %v445 = vld [vmem:[%s372 + $0x10] sm:$0xf]
        %v446 = vld [vmem:[%s372 + $0x14] sm:$0xf]
        %v447 = vld [vmem:[%s372 + $0x18] sm:$0xf]
        %v448 = vld [vmem:[%s372 + $0x1c] sm:$0xf]
        %v449 = vld [vmem:[%s372 + $0x20] sm:$0xf]
        %v450 = vld [vmem:[%s372 + $0x24] sm:$0xf]
        %v451 = vld [vmem:[%s372 + $0x28] sm:$0xf]
        %v452 = vld [vmem:[%s372 + $0x2c] sm:$0xf]
        %v453 = vld [vmem:[%s372 + $0x30] sm:$0xf]
        %v454 = vld [vmem:[%s372 + $0x34] sm:$0xf]
        %v455 = vld [vmem:[%s372 + $0x38] sm:$0xf]
        %v456 = vld [vmem:[%s372 + $0x3c] sm:$0xf]
        %v457 = vld [vmem:[#allocation9] sm:$0xf]
        %v458 = vld [vmem:[#allocation9 + $0x4] sm:$0xf]
        %v459 = vld [vmem:[#allocation9 + $0x8] sm:$0xf]
        %v460 = vld [vmem:[#allocation9 + $0xc] sm:$0xf]
        %v461 = vld [vmem:[#allocation9 + $0x10] sm:$0xf]
        %v462 = vld [vmem:[#allocation9 + $0x14] sm:$0xf]
        %v463 = vld [vmem:[#allocation9 + $0x18] sm:$0xf]
        %v464 = vld [vmem:[#allocation9 + $0x1c] sm:$0xf]
        %v465 = vld [vmem:[#allocation9 + $0x20] sm:$0xf]
        %v466 = vld [vmem:[#allocation9 + $0x24] sm:$0xf]
        %v467 = vld [vmem:[#allocation9 + $0x28] sm:$0xf]
        %v468 = vld [vmem:[#allocation9 + $0x2c] sm:$0xf]
        %v469 = vld [vmem:[#allocation9 + $0x30] sm:$0xf]
        %v470 = vld [vmem:[#allocation9 + $0x34] sm:$0xf]
        %v471 = vld [vmem:[#allocation9 + $0x38] sm:$0xf]
        %v472 = vld [vmem:[#allocation9 + $0x3c] sm:$0xf]
        %v473 = vld [vmem:[%s4] sm:$0x1]
        %v490 = vunpack.c.l.b16 %v441
        %v491 = vunpack.c.l.b16 %v442
        %v492 = vunpack.c.l.b16 %v443
        %v493 = vunpack.c.l.b16 %v444
        %v494 = vunpack.c.l.b16 %v445
        %v495 = vunpack.c.l.b16 %v446
        %v496 = vunpack.c.l.b16 %v447
        %v497 = vunpack.c.l.b16 %v448
        %v498 = vunpack.c.l.b16 %v449
        %v499 = vunpack.c.l.b16 %v450
        %v500 = vunpack.c.l.b16 %v451
        %v501 = vunpack.c.l.b16 %v452
        %v502 = vunpack.c.l.b16 %v453
        %v503 = vunpack.c.l.b16 %v454
        %v504 = vunpack.c.l.b16 %v455
        %v505 = vunpack.c.l.b16 %v456
        %v506 = vpack.c.b16 %v491, %v490
        %v507 = vpack.c.b16 %v493, %v492
        %v508 = vpack.c.b16 %v495, %v494
        %v509 = vpack.c.b16 %v497, %v496
        %v510 = vpack.c.b16 %v499, %v498
        %v511 = vpack.c.b16 %v501, %v500
        %v512 = vpack.c.b16 %v503, %v502
        %v513 = vpack.c.b16 %v505, %v504
        %v538 = vunpack.c.l.b16 %v457
        %v539 = vunpack.c.l.b16 %v458
        %v540 = vunpack.c.l.b16 %v459
        %v541 = vunpack.c.l.b16 %v460
        %v542 = vunpack.c.l.b16 %v461
        %v543 = vunpack.c.l.b16 %v462
        %v544 = vunpack.c.l.b16 %v463
        %v545 = vunpack.c.l.b16 %v464
        %v546 = vunpack.c.l.b16 %v465
        %v547 = vunpack.c.l.b16 %v466
        %v548 = vunpack.c.l.b16 %v467
        %v549 = vunpack.c.l.b16 %v468
        %v550 = vunpack.c.l.b16 %v469
        %v551 = vunpack.c.l.b16 %v470
        %v552 = vunpack.c.l.b16 %v471
        %v553 = vunpack.c.l.b16 %v472
        %v554 = vpack.c.b16 %v539, %v538
        %v555 = vpack.c.b16 %v541, %v540
        %v556 = vpack.c.b16 %v543, %v542
        %v557 = vpack.c.b16 %v545, %v544
        %v558 = vpack.c.b16 %v547, %v546
        %v559 = vpack.c.b16 %v549, %v548
        %v560 = vpack.c.b16 %v551, %v550
        %v561 = vpack.c.b16 %v553, %v552
        %570 = vmatpush.bf16.msra.mxu0 %v561
        %571 = vmatpush.bf16.msra.mxu0 %v560
        %572 = vmatpush.bf16.msra.mxu0 %v559
        %573 = vmatpush.bf16.msra.mxu0 %v558
        %574 = vmatpush.bf16.msra.mxu0 %v557
        %575 = vmatpush.bf16.msra.mxu0 %v556
        %576 = vmatpush.bf16.msra.mxu0 %v555
        %577 = vmatpush.bf16.msra.mxu0 %v554
        %578 = vmatmul.bf16.gmra.mxu0 %v506
        %v579 = vpop.f32.mrf.mxu0
        %v580 = vadd.f32 0.0, %v579
        %v581 = vpop.f32.mrf.mxu0
        %v582 = vadd.f32 0.0, %v581
        %583 = vmatmul.bf16.gmra.mxu0 %v507
        %v584 = vpop.f32.mrf.mxu0
        %v585 = vadd.f32 0.0, %v584
        %v586 = vpop.f32.mrf.mxu0
        %v587 = vadd.f32 0.0, %v586
        %588 = vmatmul.bf16.gmra.mxu0 %v508
        %v589 = vpop.f32.mrf.mxu0
        %v590 = vadd.f32 0.0, %v589
        %v591 = vpop.f32.mrf.mxu0
        %v592 = vadd.f32 0.0, %v591
        %593 = vmatmul.bf16.gmra.mxu0 %v509
        %v594 = vpop.f32.mrf.mxu0
        %v595 = vadd.f32 0.0, %v594
        %v596 = vpop.f32.mrf.mxu0
        %v597 = vadd.f32 0.0, %v596
        %598 = vmatmul.bf16.gmra.mxu0 %v510
        %v599 = vpop.f32.mrf.mxu0
        %v600 = vadd.f32 0.0, %v599
        %v601 = vpop.f32.mrf.mxu0
        %v602 = vadd.f32 0.0, %v601
        %603 = vmatmul.bf16.gmra.mxu0 %v511
        %v604 = vpop.f32.mrf.mxu0
        %v605 = vadd.f32 0.0, %v604
        %v606 = vpop.f32.mrf.mxu0
        %v607 = vadd.f32 0.0, %v606
        %608 = vmatmul.bf16.gmra.mxu0 %v512
        %v609 = vpop.f32.mrf.mxu0
        %v610 = vadd.f32 0.0, %v609
        %v611 = vpop.f32.mrf.mxu0
        %v612 = vadd.f32 0.0, %v611
        %613 = vmatmul.bf16.gmra.mxu0 %v513
        %v614 = vpop.f32.mrf.mxu0
        %v615 = vadd.f32 0.0, %v614
        %v616 = vpop.f32.mrf.mxu0
        %v617 = vadd.f32 0.0, %v616
        %618 = vdwg.mxu0
        %v619 = vpack.c.bf16 %v582, %v580
        %v620 = vpack.c.bf16 %v587, %v585
        %v621 = vpack.c.bf16 %v592, %v590
        %v622 = vpack.c.bf16 %v597, %v595
        %v623 = vpack.c.bf16 %v602, %v600
        %v624 = vpack.c.bf16 %v607, %v605
        %v625 = vpack.c.bf16 %v612, %v610
        %v626 = vpack.c.bf16 %v617, %v615
        %v628 = vperm.slane %v473, 0
        %v646 = vunpack.c.l.b16 %v425
        %v647 = vunpack.c.l.b16 %v426
        %v648 = vunpack.c.l.b16 %v427
        %v649 = vunpack.c.l.b16 %v428
        %v650 = vunpack.c.l.b16 %v429
        %v651 = vunpack.c.l.b16 %v430
        %v652 = vunpack.c.l.b16 %v431
        %v653 = vunpack.c.l.b16 %v432
        %v654 = vunpack.c.l.b16 %v433
        %v655 = vunpack.c.l.b16 %v434
        %v656 = vunpack.c.l.b16 %v435
        %v657 = vunpack.c.l.b16 %v436
        %v658 = vunpack.c.l.b16 %v437
        %v659 = vunpack.c.l.b16 %v438
        %v660 = vunpack.c.l.b16 %v439
        %v661 = vunpack.c.l.b16 %v440
        %v662 = vpack.c.b16 %v647, %v646
        %v663 = vpack.c.b16 %v649, %v648
        %v664 = vpack.c.b16 %v651, %v650
        %v665 = vpack.c.b16 %v653, %v652
        %v666 = vpack.c.b16 %v655, %v654
        %v667 = vpack.c.b16 %v657, %v656
        %v668 = vpack.c.b16 %v659, %v658
        %v669 = vpack.c.b16 %v661, %v660
        %678 = vmatpush.bf16.msra.mxu0 %v626
        %679 = vmatpush.bf16.msra.mxu0 %v625
        %680 = vmatpush.bf16.msra.mxu0 %v624
        %681 = vmatpush.bf16.msra.mxu0 %v623
        %682 = vmatpush.bf16.msra.mxu0 %v622
        %683 = vmatpush.bf16.msra.mxu0 %v621
        %684 = vmatpush.bf16.msra.mxu0 %v620
        %685 = vmatpush.bf16.msra.mxu0 %v619
        %686 = vmatmul.bf16.gmra.mxu0 %v662
        %v687 = vpop.f32.mrf.mxu0
        %v688 = vadd.f32 %v628, %v687
        %v689 = vpop.f32.mrf.mxu0
        %v690 = vadd.f32 %v628, %v689
        %691 = vmatmul.bf16.gmra.mxu0 %v663
        %v692 = vpop.f32.mrf.mxu0
        %v693 = vadd.f32 %v628, %v692
        %v694 = vpop.f32.mrf.mxu0
        %v695 = vadd.f32 %v628, %v694
        %696 = vmatmul.bf16.gmra.mxu0 %v664
        %v697 = vpop.f32.mrf.mxu0
        %v698 = vadd.f32 %v628, %v697
        %v699 = vpop.f32.mrf.mxu0
        %v700 = vadd.f32 %v628, %v699
        %701 = vmatmul.bf16.gmra.mxu0 %v665
        %v702 = vpop.f32.mrf.mxu0
        %v703 = vadd.f32 %v628, %v702
        %v704 = vpop.f32.mrf.mxu0
        %v705 = vadd.f32 %v628, %v704
        %706 = vmatmul.bf16.gmra.mxu0 %v666
        %v707 = vpop.f32.mrf.mxu0
        %v708 = vadd.f32 %v628, %v707
        %v709 = vpop.f32.mrf.mxu0
        %v710 = vadd.f32 %v628, %v709
        %711 = vmatmul.bf16.gmra.mxu0 %v667
        %v712 = vpop.f32.mrf.mxu0
        %v713 = vadd.f32 %v628, %v712
        %v714 = vpop.f32.mrf.mxu0
        %v715 = vadd.f32 %v628, %v714
        %716 = vmatmul.bf16.gmra.mxu0 %v668
        %v717 = vpop.f32.mrf.mxu0
        %v718 = vadd.f32 %v628, %v717
        %v719 = vpop.f32.mrf.mxu0
        %v720 = vadd.f32 %v628, %v719
        %721 = vmatmul.bf16.gmra.mxu0 %v669
        %v722 = vpop.f32.mrf.mxu0
        %v723 = vadd.f32 %v628, %v722
        %v724 = vpop.f32.mrf.mxu0
        %v725 = vadd.f32 %v628, %v724
        %726 = vdwg.mxu0
        %v727 = vmax.f32 %v688, 0.0
        %v728 = vmax.f32 %v690, 0.0
        %v729 = vmax.f32 %v693, 0.0
        %v730 = vmax.f32 %v695, 0.0
        %v731 = vmax.f32 %v698, 0.0
        %v732 = vmax.f32 %v700, 0.0
        %v733 = vmax.f32 %v703, 0.0
        %v734 = vmax.f32 %v705, 0.0
        %v735 = vmax.f32 %v708, 0.0
        %v736 = vmax.f32 %v710, 0.0
        %v737 = vmax.f32 %v713, 0.0
        %v738 = vmax.f32 %v715, 0.0
        %v739 = vmax.f32 %v718, 0.0
        %v740 = vmax.f32 %v720, 0.0
        %v741 = vmax.f32 %v723, 0.0
        %v742 = vmax.f32 %v725, 0.0
        %v743 = vpack.c.bf16 %v728, %v727
        %v744 = vpack.c.bf16 %v730, %v729
        %v745 = vpack.c.bf16 %v732, %v731
        %v746 = vpack.c.bf16 %v734, %v733
        %v747 = vpack.c.bf16 %v736, %v735
        %v748 = vpack.c.bf16 %v738, %v737
        %v749 = vpack.c.bf16 %v740, %v739
        %v750 = vpack.c.bf16 %v742, %v741
        %v751 = vld [vmem:[#allocation10] sm:$0xf]
        %v752 = vld [vmem:[#allocation10 + $0x4] sm:$0xf]
        %v753 = vld [vmem:[#allocation10 + $0x8] sm:$0xf]
        %v754 = vld [vmem:[#allocation10 + $0xc] sm:$0xf]
        %v755 = vld [vmem:[#allocation10 + $0x10] sm:$0xf]
        %v756 = vld [vmem:[#allocation10 + $0x14] sm:$0xf]
        %v757 = vld [vmem:[#allocation10 + $0x18] sm:$0xf]
        %v758 = vld [vmem:[#allocation10 + $0x1c] sm:$0xf]
        %v759 = vld [vmem:[#allocation10 + $0x20] sm:$0xf]
        %v760 = vld [vmem:[#allocation10 + $0x24] sm:$0xf]
        %v761 = vld [vmem:[#allocation10 + $0x28] sm:$0xf]
        %v762 = vld [vmem:[#allocation10 + $0x2c] sm:$0xf]
        %v763 = vld [vmem:[#allocation10 + $0x30] sm:$0xf]
        %v764 = vld [vmem:[#allocation10 + $0x34] sm:$0xf]
        %v765 = vld [vmem:[#allocation10 + $0x38] sm:$0xf]
        %v766 = vld [vmem:[#allocation10 + $0x3c] sm:$0xf]
        %v767 = vld [vmem:[%s6] sm:$0x1]
        %v784 = vunpack.c.l.b16 %v751
        %v785 = vunpack.c.l.b16 %v752
        %v786 = vunpack.c.l.b16 %v753
        %v787 = vunpack.c.l.b16 %v754
        %v788 = vunpack.c.l.b16 %v755
        %v789 = vunpack.c.l.b16 %v756
        %v790 = vunpack.c.l.b16 %v757
        %v791 = vunpack.c.l.b16 %v758
        %v792 = vunpack.c.l.b16 %v759
        %v793 = vunpack.c.l.b16 %v760
        %v794 = vunpack.c.l.b16 %v761
        %v795 = vunpack.c.l.b16 %v762
        %v796 = vunpack.c.l.b16 %v763
        %v797 = vunpack.c.l.b16 %v764
        %v798 = vunpack.c.l.b16 %v765
        %v799 = vunpack.c.l.b16 %v766
        %v800 = vpack.c.b16 %v785, %v784
        %v801 = vpack.c.b16 %v787, %v786
        %v802 = vpack.c.b16 %v789, %v788
        %v803 = vpack.c.b16 %v791, %v790
        %v804 = vpack.c.b16 %v793, %v792
        %v805 = vpack.c.b16 %v795, %v794
        %v806 = vpack.c.b16 %v797, %v796
        %v807 = vpack.c.b16 %v799, %v798
        %816 = vmatpush.bf16.msra.mxu0 %v807
        %817 = vmatpush.bf16.msra.mxu0 %v806
        %818 = vmatpush.bf16.msra.mxu0 %v805
        %819 = vmatpush.bf16.msra.mxu0 %v804
        %820 = vmatpush.bf16.msra.mxu0 %v803
        %821 = vmatpush.bf16.msra.mxu0 %v802
        %822 = vmatpush.bf16.msra.mxu0 %v801
        %823 = vmatpush.bf16.msra.mxu0 %v800
        %824 = vmatmul.bf16.gmra.mxu0 %v743
        %v825 = vpop.f32.mrf.mxu0
        %v826 = vadd.f32 0.0, %v825
        %v827 = vpop.f32.mrf.mxu0
        %v828 = vadd.f32 0.0, %v827
        %829 = vmatmul.bf16.gmra.mxu0 %v744
        %v830 = vpop.f32.mrf.mxu0
        %v831 = vadd.f32 0.0, %v830
        %v832 = vpop.f32.mrf.mxu0
        %v833 = vadd.f32 0.0, %v832
        %834 = vmatmul.bf16.gmra.mxu0 %v745
        %v835 = vpop.f32.mrf.mxu0
        %v836 = vadd.f32 0.0, %v835
        %v837 = vpop.f32.mrf.mxu0
        %v838 = vadd.f32 0.0, %v837
        %839 = vmatmul.bf16.gmra.mxu0 %v746
        %v840 = vpop.f32.mrf.mxu0
        %v841 = vadd.f32 0.0, %v840
        %v842 = vpop.f32.mrf.mxu0
        %v843 = vadd.f32 0.0, %v842
        %844 = vmatmul.bf16.gmra.mxu0 %v747
        %v845 = vpop.f32.mrf.mxu0
        %v846 = vadd.f32 0.0, %v845
        %v847 = vpop.f32.mrf.mxu0
        %v848 = vadd.f32 0.0, %v847
        %849 = vmatmul.bf16.gmra.mxu0 %v748
        %v850 = vpop.f32.mrf.mxu0
        %v851 = vadd.f32 0.0, %v850
        %v852 = vpop.f32.mrf.mxu0
        %v853 = vadd.f32 0.0, %v852
        %854 = vmatmul.bf16.gmra.mxu0 %v749
        %v855 = vpop.f32.mrf.mxu0
        %v856 = vadd.f32 0.0, %v855
        %v857 = vpop.f32.mrf.mxu0
        %v858 = vadd.f32 0.0, %v857
        %859 = vmatmul.bf16.gmra.mxu0 %v750
        %v860 = vpop.f32.mrf.mxu0
        %v861 = vadd.f32 0.0, %v860
        %v862 = vpop.f32.mrf.mxu0
        %v863 = vadd.f32 0.0, %v862
        %864 = vdwg.mxu0
        %v865 = vpack.c.bf16 %v828, %v826
        %v866 = vpack.c.bf16 %v833, %v831
        %v867 = vpack.c.bf16 %v838, %v836
        %v868 = vpack.c.bf16 %v843, %v841
        %v869 = vpack.c.bf16 %v848, %v846
        %v870 = vpack.c.bf16 %v853, %v851
        %v871 = vpack.c.bf16 %v858, %v856
        %v872 = vpack.c.bf16 %v863, %v861
        %v874 = vperm.slane %v767, 0
        %876 = vmatpush.bf16.msra.mxu0 %v872
        %877 = vmatpush.bf16.msra.mxu0 %v871
        %878 = vmatpush.bf16.msra.mxu0 %v870
        %879 = vmatpush.bf16.msra.mxu0 %v869
        %880 = vmatpush.bf16.msra.mxu0 %v868
        %881 = vmatpush.bf16.msra.mxu0 %v867
        %882 = vmatpush.bf16.msra.mxu0 %v866
        %883 = vmatpush.bf16.msra.mxu0 %v865
        %884 = vmatmul.bf16.gmra.mxu0 %v662
        %v885 = vpop.f32.mrf.mxu0
        %v886 = vadd.f32 %v874, %v885
        %v887 = vpop.f32.mrf.mxu0
        %v888 = vadd.f32 %v874, %v887
        %889 = vmatmul.bf16.gmra.mxu0 %v663
        %v890 = vpop.f32.mrf.mxu0
        %v891 = vadd.f32 %v874, %v890
        %v892 = vpop.f32.mrf.mxu0
        %v893 = vadd.f32 %v874, %v892
        %894 = vmatmul.bf16.gmra.mxu0 %v664
        %v895 = vpop.f32.mrf.mxu0
        %v896 = vadd.f32 %v874, %v895
        %v897 = vpop.f32.mrf.mxu0
        %v898 = vadd.f32 %v874, %v897
        %899 = vmatmul.bf16.gmra.mxu0 %v665
        %v900 = vpop.f32.mrf.mxu0
        %v901 = vadd.f32 %v874, %v900
        %v902 = vpop.f32.mrf.mxu0
        %v903 = vadd.f32 %v874, %v902
        %904 = vmatmul.bf16.gmra.mxu0 %v666
        %v905 = vpop.f32.mrf.mxu0
        %v906 = vadd.f32 %v874, %v905
        %v907 = vpop.f32.mrf.mxu0
        %v908 = vadd.f32 %v874, %v907
        %909 = vmatmul.bf16.gmra.mxu0 %v667
        %v910 = vpop.f32.mrf.mxu0
        %v911 = vadd.f32 %v874, %v910
        %v912 = vpop.f32.mrf.mxu0
        %v913 = vadd.f32 %v874, %v912
        %914 = vmatmul.bf16.gmra.mxu0 %v668
        %v915 = vpop.f32.mrf.mxu0
        %v916 = vadd.f32 %v874, %v915
        %v917 = vpop.f32.mrf.mxu0
        %v918 = vadd.f32 %v874, %v917
        %919 = vmatmul.bf16.gmra.mxu0 %v669
        %v920 = vpop.f32.mrf.mxu0
        %v921 = vadd.f32 %v874, %v920
        %v922 = vpop.f32.mrf.mxu0
        %v923 = vadd.f32 %v874, %v922
        %924 = vdwg.mxu0
        %v925 = vmax.f32 %v886, 0.0
        %v926 = vmax.f32 %v888, 0.0
        %v927 = vmax.f32 %v891, 0.0
        %v928 = vmax.f32 %v893, 0.0
        %v929 = vmax.f32 %v896, 0.0
        %v930 = vmax.f32 %v898, 0.0
        %v931 = vmax.f32 %v901, 0.0
        %v932 = vmax.f32 %v903, 0.0
        %v933 = vmax.f32 %v906, 0.0
        %v934 = vmax.f32 %v908, 0.0
        %v935 = vmax.f32 %v911, 0.0
        %v936 = vmax.f32 %v913, 0.0
        %v937 = vmax.f32 %v916, 0.0
        %v938 = vmax.f32 %v918, 0.0
        %v939 = vmax.f32 %v921, 0.0
        %v940 = vmax.f32 %v923, 0.0
        %v941 = vpack.c.bf16 %v925, %v925
        %v942 = vpack.c.bf16 %v926, %v926
        %v943 = vpack.c.bf16 %v927, %v927
        %v944 = vpack.c.bf16 %v928, %v928
        %v945 = vpack.c.bf16 %v929, %v929
        %v946 = vpack.c.bf16 %v930, %v930
        %v947 = vpack.c.bf16 %v931, %v931
        %v948 = vpack.c.bf16 %v932, %v932
        %v949 = vpack.c.bf16 %v933, %v933
        %v950 = vpack.c.bf16 %v934, %v934
        %v951 = vpack.c.bf16 %v935, %v935
        %v952 = vpack.c.bf16 %v936, %v936
        %v953 = vpack.c.bf16 %v937, %v937
        %v954 = vpack.c.bf16 %v938, %v938
        %v955 = vpack.c.bf16 %v939, %v939
        %v956 = vpack.c.bf16 %v940, %v940
        %s957 = sld [smem:[#allocation3 + %s38]]
        %p958 = scmp.gt.s32.totalorder %s957, 1
        %s959 = scalar_select %p958, %s957, 1
        %v960 = vlaneseq
        %v961 = vshrl.u32 %v960, 7
        %v962 = vadd.s32 %v961, 8
        %v963 = vadd.s32 %v961, 16
        %v964 = vadd.s32 %v961, 24
        %v965 = vadd.s32 %v961, 32
        %v966 = vadd.s32 %v961, 40
        %v967 = vadd.s32 %v961, 48
        %v968 = vadd.s32 %v961, 56
        %v969 = vadd.s32 %v961, 64
        %v970 = vadd.s32 %v961, 72
        %v971 = vadd.s32 %v961, 80
        %v972 = vadd.s32 %v961, 88
        %v973 = vadd.s32 %v961, 96
        %v974 = vadd.s32 %v961, 104
        %v975 = vadd.s32 %v961, 112
        %v976 = vadd.s32 %v961, 120
        %v977 = vstv %s959
        %vm978 = vcmp.lt.s32.totalorder %v961, %v977
        %vm979 = vcmp.lt.s32.totalorder %v962, %v977
        %vm980 = vcmp.lt.s32.totalorder %v963, %v977
        %vm981 = vcmp.lt.s32.totalorder %v964, %v977
        %vm982 = vcmp.lt.s32.totalorder %v965, %v977
        %vm983 = vcmp.lt.s32.totalorder %v966, %v977
        %vm984 = vcmp.lt.s32.totalorder %v967, %v977
        %vm985 = vcmp.lt.s32.totalorder %v968, %v977
        %vm986 = vcmp.lt.s32.totalorder %v969, %v977
        %vm987 = vcmp.lt.s32.totalorder %v970, %v977
        %vm988 = vcmp.lt.s32.totalorder %v971, %v977
        %vm989 = vcmp.lt.s32.totalorder %v972, %v977
        %vm990 = vcmp.lt.s32.totalorder %v973, %v977
        %vm991 = vcmp.lt.s32.totalorder %v974, %v977
        %vm992 = vcmp.lt.s32.totalorder %v975, %v977
        %vm993 = vcmp.lt.s32.totalorder %v976, %v977
        %v994 = vsel %vm978, 1, 0
        %v995 = vsel %vm979, 1, 0
        %v996 = vsel %vm980, 1, 0
        %v997 = vsel %vm981, 1, 0
        %v998 = vsel %vm982, 1, 0
        %v999 = vsel %vm983, 1, 0
        %v1000 = vsel %vm984, 1, 0
        %v1001 = vsel %vm985, 1, 0
        %v1002 = vsel %vm986, 1, 0
        %v1003 = vsel %vm987, 1, 0
        %v1004 = vsel %vm988, 1, 0
        %v1005 = vsel %vm989, 1, 0
        %v1006 = vsel %vm990, 1, 0
        %v1007 = vsel %vm991, 1, 0
        %v1008 = vsel %vm992, 1, 0
        %v1009 = vsel %vm993, 1, 0
        %v1010 = vcvt.s32.f32 %v994
        %v1011 = vcvt.s32.f32 %v995
        %v1012 = vcvt.s32.f32 %v996
        %v1013 = vcvt.s32.f32 %v997
        %v1014 = vcvt.s32.f32 %v998
        %v1015 = vcvt.s32.f32 %v999
        %v1016 = vcvt.s32.f32 %v1000
        %v1017 = vcvt.s32.f32 %v1001
        %v1018 = vcvt.s32.f32 %v1002
        %v1019 = vcvt.s32.f32 %v1003
        %v1020 = vcvt.s32.f32 %v1004
        %v1021 = vcvt.s32.f32 %v1005
        %v1022 = vcvt.s32.f32 %v1006
        %v1023 = vcvt.s32.f32 %v1007
        %v1024 = vcvt.s32.f32 %v1008
        %v1025 = vcvt.s32.f32 %v1009
        %v1026 = vunpack.c.l.bf16 %v941
        %v1027 = vunpack.c.l.bf16 %v942
        %v1028 = vunpack.c.l.bf16 %v943
        %v1029 = vunpack.c.l.bf16 %v944
        %v1030 = vunpack.c.l.bf16 %v945
        %v1031 = vunpack.c.l.bf16 %v946
        %v1032 = vunpack.c.l.bf16 %v947
        %v1033 = vunpack.c.l.bf16 %v948
        %v1034 = vunpack.c.l.bf16 %v949
        %v1035 = vunpack.c.l.bf16 %v950
        %v1036 = vunpack.c.l.bf16 %v951
        %v1037 = vunpack.c.l.bf16 %v952
        %v1038 = vunpack.c.l.bf16 %v953
        %v1039 = vunpack.c.l.bf16 %v954
        %v1040 = vunpack.c.l.bf16 %v955
        %v1041 = vunpack.c.l.bf16 %v956
        %v1042 = vmul.f32 %v1026, %v1010
        %v1043 = vmul.f32 %v1027, %v1011
        %v1044 = vmul.f32 %v1028, %v1012
        %v1045 = vmul.f32 %v1029, %v1013
        %v1046 = vmul.f32 %v1030, %v1014
        %v1047 = vmul.f32 %v1031, %v1015
        %v1048 = vmul.f32 %v1032, %v1016
        %v1049 = vmul.f32 %v1033, %v1017
        %v1050 = vmul.f32 %v1034, %v1018
        %v1051 = vmul.f32 %v1035, %v1019
        %v1052 = vmul.f32 %v1036, %v1020
        %v1053 = vmul.f32 %v1037, %v1021
        %v1054 = vmul.f32 %v1038, %v1022
        %v1055 = vmul.f32 %v1039, %v1023
        %v1056 = vmul.f32 %v1040, %v1024
        %v1057 = vmul.f32 %v1041, %v1025
        %v1058 = vadd.f32 %v1042, %v1043
        %v1059 = vadd.f32 %v1058, %v1044
        %v1060 = vadd.f32 %v1059, %v1045
        %v1061 = vadd.f32 %v1060, %v1046
        %v1062 = vadd.f32 %v1061, %v1047
        %v1063 = vadd.f32 %v1062, %v1048
        %v1064 = vadd.f32 %v1063, %v1049
        %v1065 = vadd.f32 %v1064, %v1050
        %v1066 = vadd.f32 %v1065, %v1051
        %v1067 = vadd.f32 %v1066, %v1052
        %v1068 = vadd.f32 %v1067, %v1053
        %v1069 = vadd.f32 %v1068, %v1054
        %v1070 = vadd.f32 %v1069, %v1055
        %v1071 = vadd.f32 %v1070, %v1056
        %v1072 = vadd.f32 %v1071, %v1057
        %v1073 = vrot.slane %v1072, 4
        %v1074 = vadd.f32 %v1072, %v1073
        %v1075 = vrot.slane %v1074, 2
        %v1076 = vadd.f32 %v1074, %v1075
        %v1077 = vrot.slane %v1076, 1
        %v1078 = vadd.f32 %v1076, %v1077
        %s1079 = scvt.s32.f32 %s959
        %v1080 = vstv %s1079
        %v1081 = vrcp.pop %v1080
        %v1082 = vmul.f32 %v1080, %v1081
        %v1083 = vsub.f32 1.0, %v1082
        %v1084 = vmul.f32 %v1081, %v1083
        %v1085 = vadd.f32 %v1081, %v1084
        %vm1086 = vweird.f32 %v1080
        %vm1087 = vweird.f32 %v1081
        %vm1088 = vmor %vm1086, %vm1087
        %v1089 = vsel %vm1088, %v1081, %v1085
        %v1090 = vand.u32 2147483647, %v1080
        %vm1091 = vcmp.eq.f32.partialorder %v1090, 8.507059e+37
        %v1092 = vand.u32 %v1080, 2147483648
        %v1093 = vor.u32 1.1754944e-38, %v1092
        %v1094 = vsel %vm1091, %v1093, %v1089
        %v1095 = vmul.f32 %v1078, %v1094
        %v1096 = vpack.c.bf16 %v1095, %v1095
        %v1097 = vld [vmem:[#allocation12] sm:$0xf]
        %v1098 = vld [vmem:[#allocation12 + $0x4] sm:$0xf]
        %v1099 = vld [vmem:[#allocation12 + $0x8] sm:$0xf]
        %v1100 = vld [vmem:[#allocation12 + $0xc] sm:$0xf]
        %v1101 = vld [vmem:[#allocation12 + $0x10] sm:$0xf]
        %v1102 = vld [vmem:[#allocation12 + $0x14] sm:$0xf]
        %v1103 = vld [vmem:[#allocation12 + $0x18] sm:$0xf]
        %v1104 = vld [vmem:[#allocation12 + $0x1c] sm:$0xf]
        %v1105 = vld [vmem:[#allocation12 + $0x20] sm:$0xf]
        %v1106 = vld [vmem:[#allocation12 + $0x24] sm:$0xf]
        %v1107 = vld [vmem:[#allocation12 + $0x28] sm:$0xf]
        %v1108 = vld [vmem:[#allocation12 + $0x2c] sm:$0xf]
        %v1109 = vld [vmem:[#allocation12 + $0x30] sm:$0xf]
        %v1110 = vld [vmem:[#allocation12 + $0x34] sm:$0xf]
        %v1111 = vld [vmem:[#allocation12 + $0x38] sm:$0xf]
        %v1112 = vld [vmem:[#allocation12 + $0x3c] sm:$0xf]
        %v1113 = vld [vmem:[%s8] sm:$0x1]
        %v1130 = vunpack.c.l.b16 %v1097
        %v1131 = vunpack.c.l.b16 %v1098
        %v1132 = vunpack.c.l.b16 %v1099
        %v1133 = vunpack.c.l.b16 %v1100
        %v1134 = vunpack.c.l.b16 %v1101
        %v1135 = vunpack.c.l.b16 %v1102
        %v1136 = vunpack.c.l.b16 %v1103
        %v1137 = vunpack.c.l.b16 %v1104
        %v1138 = vunpack.c.l.b16 %v1105
        %v1139 = vunpack.c.l.b16 %v1106
        %v1140 = vunpack.c.l.b16 %v1107
        %v1141 = vunpack.c.l.b16 %v1108
        %v1142 = vunpack.c.l.b16 %v1109
        %v1143 = vunpack.c.l.b16 %v1110
        %v1144 = vunpack.c.l.b16 %v1111
        %v1145 = vunpack.c.l.b16 %v1112
        %v1146 = vpack.c.b16 %v1131, %v1130
        %v1147 = vpack.c.b16 %v1133, %v1132
        %v1148 = vpack.c.b16 %v1135, %v1134
        %v1149 = vpack.c.b16 %v1137, %v1136
        %v1150 = vpack.c.b16 %v1139, %v1138
        %v1151 = vpack.c.b16 %v1141, %v1140
        %v1152 = vpack.c.b16 %v1143, %v1142
        %v1153 = vpack.c.b16 %v1145, %v1144
        %1162 = vmatpush.bf16.msra.mxu0 %v1153
        %1163 = vmatpush.bf16.msra.mxu0 %v1152
        %1164 = vmatpush.bf16.msra.mxu0 %v1151
        %1165 = vmatpush.bf16.msra.mxu0 %v1150
        %1166 = vmatpush.bf16.msra.mxu0 %v1149
        %1167 = vmatpush.bf16.msra.mxu0 %v1148
        %1168 = vmatpush.bf16.msra.mxu0 %v1147
        %1169 = vmatpush.bf16.msra.mxu0 %v1146
        %1170 = vmatmul.bf16.gmra.mxu0 %v1096
        %v1171 = vpop.f32.mrf.mxu0
        %v1172 = vadd.f32 %v1113, %v1171
        %v1173 = vpop.f32.mrf.mxu0
        %1174 = vdwg.mxu0
        %v1175 = vlaneseq
        %v1176 = vand.u32 %v1175, 127
        %vm1177 = vcmp.lt.s32.totalorder %v1176, 4
        %v1178 = vsel %vm1177, %v1172, -1e+30
        %vm1179 = vcmask 1040384
        %v1180 = vsel %vm1179, %v1178, -inf
        %1181 = vmax.xlane.f32.xlu0 %v1180
        %v1182 = vpop.xlane.xlu0 %1181
        %v1183 = vsub.f32 %v1178, %v1182
        %v1184 = vmul.f32 %v1183, 1.442695
        %v1185 = vpow.pop %v1184
        %v1186 = vsel %vm1179, %v1185, 0.0
        %1187 = vadd.xlane.f32.xlu0 %v1186
        %v1188 = vpop.xlane.xlu0 %1187
        %v1189 = vrcp.pop %v1188
        %v1190 = vmul.f32 %v1188, %v1189
        %v1191 = vsub.f32 1.0, %v1190
        %v1192 = vmul.f32 %v1189, %v1191
        %v1193 = vadd.f32 %v1189, %v1192
        %vm1194 = vweird.f32 %v1188
        %vm1195 = vweird.f32 %v1189
        %vm1196 = vmor %vm1194, %vm1195
        %v1197 = vsel %vm1196, %v1189, %v1193
        %v1198 = vand.u32 2147483647, %v1188
        %vm1199 = vcmp.eq.f32.partialorder %v1198, 8.507059e+37
        %v1200 = vand.u32 %v1188, 2147483648
        %v1201 = vor.u32 1.1754944e-38, %v1200
        %v1202 = vsel %vm1199, %v1201, %v1197
        %v1203 = vmul.f32 %v1185, %v1202
        %1204 = vst [vmem:[%s424] sm:$0x1] %v1203
        %s1205 = sand.u32 %s224, 1
        %s1206 = scalar_lea.sflag [#allocation6], %s1205
        %s1207 = sand.u32 %s224, 1
        %s1208 = scalar_lea.vmem [#allocation13], %s1207
        // Predicated region
        $region73: #{gcn_forward.1} parent=51 // pred_check
          %p1209 = pneg %p234
        $region74: #{gcn_forward.1} parent=51 // pred_check_branch
          %1211 = sbr.rel (%p1209) target = $region76
        $region75: #{gcn_forward.1} parent=51 // pred_region
          %1213 = vsyncadd %s1206, 0
          %s1214 = scalar_lea.hbm %s9, %s38
          %s1216 = sshll.u32 %s1208, 4
          %s1217 = int_to_ptr.vmem [resolvable:$true] %s1216
          %s1218 = sshll.u32 %s1214, 4
          %s1219 = int_to_ptr.hbm [resolvable:$true] %s1218
          %1221 = dma.vmem_to_hbm [thread:$0]  %s1217, 16, %s1219, %s1206
        $region76: #{gcn_forward.1} parent=51 // pred_fallthru
          _
      $region52: #{gcn_forward.1} parent=5 // pred_fallthru
        _
      %p1222 = scmp.le.s32.totalorder 2, %s33
      // Predicated region
      $region77: #{gcn_forward.1} parent=5 // pred_check
        %p1223 = pneg %p1222
      $region78: #{gcn_forward.1} parent=5 // pred_check_branch
        %1225 = sbr.rel (%p1223) target = $region80
      $region79: #{gcn_forward.1} parent=5 // pred_region
        %s1226 = ssub.s32 %s33, 2
        // Predicated region
        $region81: #{gcn_forward.1} parent=79 // pred_check
          %p1227 = pneg %p240
        $region82: #{gcn_forward.1} parent=79 // pred_check_branch
          %1229 = sbr.rel (%p1227) target = $region84
        $region83: #{gcn_forward.1} parent=79 // pred_region
          %s1230 = sand.u32 %s225, 1
          %s1231 = scalar_lea.sflag [#allocation6], %s1230
          %s1232 = sand.u32 %s225, 1
          %s1233 = scalar_lea.vmem [#allocation13], %s1232
          %1235 = dma.done %s1231, 16
        $region84: #{gcn_forward.1} parent=79 // pred_fallthru
          _
      $region80: #{gcn_forward.1} parent=5 // pred_fallthru
        _
    $region6: #{gcn_forward.1} parent=1 // loop_footer
      %s37 = sadd.s32 1, %s33
    $region7: #{gcn_forward.1} parent=1 // loop_footer_branch
      %32 = sbr.rel target = $region3
    $region8: #{gcn_forward.1} parent=1 // loop_exit
      _
    %1236 = vsyncpa [#allocation5], 1
    %s1237 = scalar_lea.sflag [#allocation5], 1
    %1238 = vsyncpa %s1237, 1
    %1239 = vsyncpa [#allocation8], 1
    %s1240 = scalar_lea.sflag [#allocation8], 1
    %1241 = vsyncpa %s1240, 1
    %1242 = vsyncpa [#allocation11], 1
    %1243 = vsyncpa [#allocation6], 1
    %s1244 = scalar_lea.sflag [#allocation6], 1
    %1245 = vsyncpa %s1244, 1

</llo_original>
